<compile_context>
chip_gen: v7x
topology: tpu7x:2x2x1
jax: 0.10.0
libtpu: 0.0.40
codegen_flags: <defaults>
</compile_context>

<pallas_src>
import functools

import jax
import jax.numpy as jnp
from jax.experimental import pallas as pl
from jax.experimental.pallas import tpu as pltpu


def _dann_kernel(xc_ref, w_ref, b_ref, fcw_ref, fcb_ref, o_ref, acc_ref, *, B, R, K, Cout):
    """One (batch-block, row-tile) step: conv(im2col matmul) + bias + ReLU + partial fc reduce."""
    r = pl.program_id(1)

    @pl.when(r == 0)
    def _init():
        acc_ref[...] = jnp.zeros_like(acc_ref)

    # conv3x3 as a single im2col matmul (K = 9*Cin) covering all B images of this row tile.
    xc = xc_ref[...].reshape(B * R, K)                                      # bf16, layout-free merge
    conv = jnp.dot(xc, w_ref[...], preferred_element_type=jnp.float32)      # (B*R, Cout) f32 on MXU
    h = jnp.maximum(conv + b_ref[...], 0.0)                                 # bias + ReLU, f32

    # fc partial: per-image sublane reduce into a (B, Cout) accumulator; the single cross-lane
    # reduce of Cout values happens only once, at the last row tile.
    fcw = fcw_ref[...].astype(jnp.float32)                                  # (R, Cout)
    partial = jnp.sum(h.reshape(B, R, Cout) * fcw[None, :, :], axis=1)      # (B, Cout)
    acc_ref[...] += partial

    @pl.when(r == pl.num_programs(1) - 1)
    def _finalize():
        logits = jnp.sum(acc_ref[...], axis=1, keepdims=True) + fcb_ref[0, 0]   # (B, 1)
        o_ref[...] = jnp.broadcast_to(logits.reshape(B, 1, 1), o_ref.shape).astype(o_ref.dtype)


def _pick_row_tile(hw, cap):
    """Largest divisor of hw that is sublane-friendly (multiple of 16, else 8) and <= cap."""
    if hw <= cap:
        return hw
    for align in (16, 8):
        for t in range(cap - cap % align, align - 1, -align):
            if hw % t == 0:
                return t
    return hw


def domain_classification_branch(x_nchw, conv_w, conv_b, fc_w, fc_b, *, r_tile_cap=2048):
    """x_nchw: (N, Cin, H, W) f32.  conv_w: (Cout, Cin, 3, 3).  conv_b: (Cout,).
    fc_w: (1, Cout*H*W).  fc_b: (1,).  Returns (N, 1) logits, matching the PyTorch forward."""
    N, Cin, H, W = x_nchw.shape
    Cout = conv_w.shape[0]
    HW = H * W
    K = 9 * Cin

    # ---- layout plumbing (wrapper side only) ----
    # im2col columns in (dy, dx, cin) order -> lane-dense (N, H*W, 9*Cin), bf16.
    x_nhwc = jnp.transpose(x_nchw, (0, 2, 3, 1)).astype(jnp.float32)
    x_pad = jnp.pad(x_nhwc, ((0, 0), (1, 1), (1, 1), (0, 0)))               # (N, H+2, W+2, Cin)
    cols = [x_pad[:, dy:dy + H, dx:dx + W, :] for dy in range(3) for dx in range(3)]
    x_cols = jnp.concatenate(cols, axis=-1).reshape(N, HW, K).astype(jnp.bfloat16)

    # conv weight -> (9*Cin, Cout) rows in the same (dy, dx, cin) order.
    w_k = jnp.transpose(conv_w, (2, 3, 1, 0)).reshape(K, Cout).astype(jnp.bfloat16)
    b_k = conv_b.reshape(1, Cout).astype(jnp.float32)

    # PyTorch NCHW flatten index = c*(H*W) + h*W + w  ->  fc weight permuted to (H*W, Cout).
    fcw_k = fc_w.reshape(Cout, H, W).transpose(1, 2, 0).reshape(HW, Cout).astype(jnp.bfloat16)
    fcb_k = fc_b.reshape(1, 1).astype(jnp.float32)

    # ---- tiling ----
    r_tile = _pick_row_tile(HW, r_tile_cap)
    b_tile = N if N <= 8 else (8 if N % 8 == 0 else N)

    kernel = functools.partial(_dann_kernel, B=b_tile, R=r_tile, K=K, Cout=Cout)
    out = pl.pallas_call(
        kernel,
        out_shape=jax.ShapeDtypeStruct((N, 1, 128), jnp.float32),           # lane-dense logit slab
        grid_spec=pltpu.PrefetchScalarGridSpec(
            num_scalar_prefetch=0,
            grid=(N // b_tile, HW // r_tile),
            in_specs=[
                pl.BlockSpec((b_tile, r_tile, K), lambda b, r: (b, r, 0)),   # im2col columns
                pl.BlockSpec((K, Cout), lambda b, r: (0, 0)),                # conv weight (invariant)
                pl.BlockSpec((1, Cout), lambda b, r: (0, 0)),                # conv bias   (invariant)
                pl.BlockSpec((r_tile, Cout), lambda b, r: (r, 0)),           # fc weight row tile
                pl.BlockSpec(memory_space=pltpu.MemorySpace.SMEM),           # fc bias scalar
            ],
            out_specs=pl.BlockSpec((b_tile, 1, 128), lambda b, r: (b, 0, 0)),
            scratch_shapes=[pltpu.VMEM((b_tile, Cout), jnp.float32)],        # per-image fc accumulator
        ),
        compiler_params=pltpu.CompilerParams(
            dimension_semantics=("parallel", "arbitrary")),
    )(x_cols, w_k, b_k, fcw_k, fcb_k)
    return out[:, 0, :1]  # (N, 1)


def _reference(x_nchw, conv_w, conv_b, fc_w, fc_b):
    """Pure-JAX f32 reference mirroring the PyTorch forward (NCHW)."""
    y = jax.lax.conv_general_dilated(
        x_nchw, conv_w, window_strides=(1, 1), padding=((1, 1), (1, 1)),
        dimension_numbers=("NCHW", "OIHW", "NCHW"))
    y = y + conv_b[None, :, None, None]
    y = jnp.maximum(y, 0.0)
    y = y.reshape(y.shape[0], -1)
    return y @ fc_w.T + fc_b[None, :]


if __name__ == "__main__":
    # Small shapes consistent with the module: batch=2, input_channels=3, spatial=16, Cout=64.
    N, Cin, H, W, Cout = 2, 3, 16, 16, 64

    key = jax.random.PRNGKey(0)
    k_x, k_cw, k_cb, k_fw, k_fb = jax.random.split(key, 5)

    x = jax.random.normal(k_x, (N, Cin, H, W), jnp.float32)
    conv_w = 0.1 * jax.random.normal(k_cw, (Cout, Cin, 3, 3), jnp.float32)
    conv_b = 0.1 * jax.random.normal(k_cb, (Cout,), jnp.float32)
    fc_w = 0.01 * jax.random.normal(k_fw, (1, Cout * H * W), jnp.float32)
    fc_b = 0.01 * jax.random.normal(k_fb, (1,), jnp.float32)

    ref = _reference(x, conv_w, conv_b, fc_w, fc_b)

    # Run once with a single row tile and once with 4 row tiles (exercises the pl.when
    # init/accumulate/finalize path that the 224x224 config relies on).
    out_single = jax.block_until_ready(domain_classification_branch(x, conv_w, conv_b, fc_w, fc_b))
    out_tiled = jax.block_until_ready(
        domain_classification_branch(x, conv_w, conv_b, fc_w, fc_b, r_tile_cap=64))

    for out in (out_single, out_tiled):
        assert out.shape == (N, 1), out.shape
        # bf16 MXU inputs (x-cols, conv w, fc w) vs f32 reference -> relaxed tolerance.
        assert jnp.allclose(out, ref, rtol=2e-2, atol=2e-2), (out, ref)

    print("KERNEL_OK")
</pallas_src>

<mosaic_0001>
module attributes {stable_mosaic.version = 11 : i64} {
  func.func @_dann_kernel(%arg0: i32, %arg1: i32, %arg2: memref<2x256x27xbf16, #tpu.memory_space<vmem>>, %arg3: memref<27x64xbf16, #tpu.memory_space<vmem>>, %arg4: memref<1x64xf32, #tpu.memory_space<vmem>>, %arg5: memref<256x64xbf16, #tpu.memory_space<vmem>>, %arg6: memref<1x1xf32, #tpu.memory_space<smem>>, %arg7: memref<2x1x128xf32, #tpu.memory_space<vmem>>, %arg8: memref<2x64xf32, #tpu.memory_space<vmem>>) attributes {dimension_semantics = [#tpu.dimension_semantics<parallel>, #tpu.dimension_semantics<arbitrary>], iteration_bounds = array<i64: 1, 1>, scalar_prefetch = 0 : i64, scratch_operands = 1 : i64, tpu.core_type = #tpu.core_type<tc>, window_params = [{transform_indices = @transform_0, window_bounds = array<i64: 2, 256, 27>}, {pipeline_mode = #tpu.pipeline_mode<synchronous>, transform_indices = @transform_1, window_bounds = array<i64: 27, 64>}, {pipeline_mode = #tpu.pipeline_mode<synchronous>, transform_indices = @transform_2, window_bounds = array<i64: 1, 64>}, {transform_indices = @transform_3, window_bounds = array<i64: 256, 64>}, {transform_indices = @transform_4, window_bounds = array<i64: 1, 1>}, {transform_indices = @transform_5, window_bounds = array<i64: 2, 1, 128>}]} {
    %c0_i32 = arith.constant 0 : i32
    %0 = arith.cmpi eq, %arg1, %c0_i32 : i32
    %1 = arith.extui %0 : i1 to i32
    %c0_i32_0 = arith.constant 0 : i32
    %2 = arith.cmpi ne, %1, %c0_i32_0 : i32
    scf.if %2 {
      %cst_17 = arith.constant 0.000000e+00 : f32
      %25 = vector.broadcast %cst_17 : f32 to vector<2x64xf32>
      %c0_18 = arith.constant 0 : index
      %c0_19 = arith.constant 0 : index
      %26 = vector.load %arg8[%c0_18, %c0_19] : memref<2x64xf32, #tpu.memory_space<vmem>>, vector<2x64xf32>
      tpu.vector_store %arg8[%c0_18, %c0_19], %25 {strides = array<i32>} : memref<2x64xf32, #tpu.memory_space<vmem>>, vector<2x64xf32>,
    } else {
    }
    %c0 = arith.constant 0 : index
    %c0_1 = arith.constant 0 : index
    %c0_2 = arith.constant 0 : index
    %3 = vector.load %arg2[%c0, %c0_1, %c0_2] : memref<2x256x27xbf16, #tpu.memory_space<vmem>>, vector<2x256x27xbf16>
    %4 = vector.shape_cast %3 : vector<2x256x27xbf16> to vector<512x27xbf16>
    %c0_3 = arith.constant 0 : index
    %c0_4 = arith.constant 0 : index
    %5 = vector.load %arg3[%c0_3, %c0_4] : memref<27x64xbf16, #tpu.memory_space<vmem>>, vector<27x64xbf16>
    %cst = arith.constant dense<0.000000e+00> : vector<512x64xf32>
    %6 = tpu.matmul %4, %5, %cst {dimension_numbers = #tpu.dot_dimension_numbers<[1], [0], [0], [1], [0, 0, 1, 1], [], []>} : vector<512x27xbf16>, vector<27x64xbf16>, vector<512x64xf32> -> vector<512x64xf32>
    %c0_5 = arith.constant 0 : index
    %c0_6 = arith.constant 0 : index
    %7 = vector.load %arg4[%c0_5, %c0_6] : memref<1x64xf32, #tpu.memory_space<vmem>>, vector<1x64xf32>
    %8 = vector.broadcast %7 : vector<1x64xf32> to vector<512x64xf32>
    %9 = arith.addf %6, %8 : vector<512x64xf32>
    %cst_7 = arith.constant 0.000000e+00 : f32
    %10 = vector.broadcast %cst_7 : f32 to vector<512x64xf32>
    %11 = arith.maximumf %9, %10 : vector<512x64xf32>
    %c0_8 = arith.constant 0 : index
    %c0_9 = arith.constant 0 : index
    %12 = vector.load %arg5[%c0_8, %c0_9] : memref<256x64xbf16, #tpu.memory_space<vmem>>, vector<256x64xbf16>
    %13 = arith.extf %12 : vector<256x64xbf16> to vector<256x64xf32>
    %14 = vector.shape_cast %11 : vector<512x64xf32> to vector<2x256x64xf32>
    %15 = vector.shape_cast %13 : vector<256x64xf32> to vector<1x256x64xf32>
    %16 = vector.broadcast %15 : vector<1x256x64xf32> to vector<2x256x64xf32>
    %17 = arith.mulf %14, %16 : vector<2x256x64xf32>
    %cst_10 = arith.constant dense<0.000000e+00> : vector<2x64xf32>
    %18 = vector.multi_reduction <add>, %17, %cst_10 [1] : vector<2x256x64xf32> to vector<2x64xf32>
    %c0_11 = arith.constant 0 : index
    %c0_12 = arith.constant 0 : index
    %19 = vector.load %arg8[%c0_11, %c0_12] : memref<2x64xf32, #tpu.memory_space<vmem>>, vector<2x64xf32>
    %20 = arith.addf %19, %18 : vector<2x64xf32>
    %c0_13 = arith.constant 0 : index
    %c0_14 = arith.constant 0 : index
    %21 = vector.load %arg8[%c0_13, %c0_14] : memref<2x64xf32, #tpu.memory_space<vmem>>, vector<2x64xf32>
    tpu.vector_store %arg8[%c0_13, %c0_14], %20 {strides = array<i32>} : memref<2x64xf32, #tpu.memory_space<vmem>>, vector<2x64xf32>,
    %c0_i32_15 = arith.constant 0 : i32
    %22 = arith.cmpi eq, %arg1, %c0_i32_15 : i32
    %23 = arith.extui %22 : i1 to i32
    %c0_i32_16 = arith.constant 0 : i32
    %24 = arith.cmpi ne, %23, %c0_i32_16 : i32
    scf.if %24 {
      %c0_17 = arith.constant 0 : index
      %c0_18 = arith.constant 0 : index
      %25 = vector.load %arg8[%c0_17, %c0_18] : memref<2x64xf32, #tpu.memory_space<vmem>>, vector<2x64xf32>
      %cst_19 = arith.constant dense<0.000000e+00> : vector<2xf32>
      %26 = vector.multi_reduction <add>, %25, %cst_19 [1] : vector<2x64xf32> to vector<2xf32>
      %27 = vector.shape_cast %26 : vector<2xf32> to vector<2x1xf32>
      %c0_20 = arith.constant 0 : index
      %c0_21 = arith.constant 0 : index
      %28 = memref.load %arg6[%c0_20, %c0_21] : memref<1x1xf32, #tpu.memory_space<smem>>
      %29 = vector.broadcast %28 : f32 to vector<2x1xf32>
      %30 = arith.addf %27, %29 : vector<2x1xf32>
      %31 = vector.shape_cast %30 : vector<2x1xf32> to vector<2x1x1xf32>
      %32 = vector.shape_cast %31 : vector<2x1x1xf32> to vector<2x1x1xf32>
      %33 = vector.broadcast %32 : vector<2x1x1xf32> to vector<2x1x128xf32>
      %c0_22 = arith.constant 0 : index
      %c0_23 = arith.constant 0 : index
      %c0_24 = arith.constant 0 : index
      %34 = vector.load %arg7[%c0_22, %c0_23, %c0_24] : memref<2x1x128xf32, #tpu.memory_space<vmem>>, vector<2x1x128xf32>
      tpu.vector_store %arg7[%c0_22, %c0_23, %c0_24], %33 {strides = array<i32>} : memref<2x1x128xf32, #tpu.memory_space<vmem>>, vector<2x1x128xf32>,
    } else {
    }
    return
  }
  func.func @transform_0(%arg0: i32, %arg1: i32) -> (i32, i32, i32) {
    %c0_i32 = arith.constant 0 : i32
    %c0_i32_0 = arith.constant 0 : i32
    return %arg0, %arg1, %c0_i32 : i32, i32, i32
  }
  func.func @transform_1(%arg0: i32, %arg1: i32) -> (i32, i32) {
    %c0_i32 = arith.constant 0 : i32
    %c0_i32_0 = arith.constant 0 : i32
    %c0_i32_1 = arith.constant 0 : i32
    return %c0_i32, %c0_i32_0 : i32, i32
  }
  func.func @transform_2(%arg0: i32, %arg1: i32) -> (i32, i32) {
    %c0_i32 = arith.constant 0 : i32
    %c0_i32_0 = arith.constant 0 : i32
    %c0_i32_1 = arith.constant 0 : i32
    return %c0_i32, %c0_i32_0 : i32, i32
  }
  func.func @transform_3(%arg0: i32, %arg1: i32) -> (i32, i32) {
    %c0_i32 = arith.constant 0 : i32
    %c0_i32_0 = arith.constant 0 : i32
    return %arg1, %c0_i32 : i32, i32
  }
  func.func @transform_4(%arg0: i32, %arg1: i32) -> (i32, i32) {
    %c0_i32 = arith.constant 0 : i32
    %c0_i32_0 = arith.constant 0 : i32
    %c0_i32_1 = arith.constant 0 : i32
    return %c0_i32, %c0_i32_0 : i32, i32
  }
  func.func @transform_5(%arg0: i32, %arg1: i32) -> (i32, i32, i32) {
    %c0_i32 = arith.constant 0 : i32
    %c0_i32_0 = arith.constant 0 : i32
    %c0_i32_1 = arith.constant 0 : i32
    return %arg0, %c0_i32, %c0_i32_0 : i32, i32, i32
  }
}

</mosaic_0001>

<llo_original>
// kernel: tpu_custom_call.1
$region0: #{tpu_custom_call.1}
  #allocation0 [shape = 'u32[]', space=smem, size = 0x4, offset = 0x4, fixed_abs, tag = 'smem constant byte address 0x4 - core index']
  #allocation1 [shape = 'u32[144,128]{1,0:T(1,128)}', space=vmem, size = 0x12000, scoped, tag = 'internal scratch']
  #allocation2 [shape = 'f32[2,64]{1,0:T(2,128)}', space=vmem, size = 0x400, scoped, tag = 'scratch operand']
  #allocation3 [shape = 'f32[1,1]{1,0:T(1,128)S(6)}', space=smem, size = 0x200, scoped, tag = 'scoped memory for tpu_custom_call.1']
  %s0 = inlined_call_operand.vmem [shape: bf16[2,256,27], index: 0, kind: input, shape index: {}]
  %s1 = inlined_call_operand.vmem [shape: bf16[27,64], index: 1, kind: input, shape index: {}]
  %s2 = inlined_call_operand.vmem [shape: f32[1,64], index: 2, kind: input, shape index: {}]
  %s3 = inlined_call_operand.vmem [shape: bf16[256,64], index: 3, kind: input, shape index: {}]
  %s4 = inlined_call_operand.<no memory space> [shape: f32[1,1], index: 4, kind: input, shape index: {}]
  %s5 = inlined_call_operand.hbm [shape: f32[2,1,128], index: 5, kind: output, shape index: {}]
  %s6 = sld [smem:[#allocation0]]
  $region38: #{tpu_custom_call.1} parent=0
    _
  %s8 = ssub.s32 1, %s6
  %s9 = scalar_select 0, %s8, %s6
  %10 = sst [smem:[#allocation3]] %s4
  $region1: #{tpu_custom_call.1} parent=0
    #allocation4 [shape = 'u8[1024]{0}', space=vmem, size = 0x400, scoped, tag = 'output window, operand 0, single buffered']
    #allocation5 [shape = 's32[1]{0}', space=sflag, size = 0x4, scoped, tag = 'scoped memory for tpu_custom_call.1']
    %11 = vsyncpa [#allocation5], 0
    // Predicated region
    $region2: #{tpu_custom_call.1} parent=1 // pred_check
      _
    $region3: #{tpu_custom_call.1} parent=1 // pred_check_branch
      %13 = sbr.rel (0) target = $region5
    $region4: #{tpu_custom_call.1} parent=1 // pred_region
      _
    $region5: #{tpu_custom_call.1} parent=1 // pred_fallthru
      _
    // Predicated region
    $region6: #{tpu_custom_call.1} parent=1 // pred_check
      _
    $region7: #{tpu_custom_call.1} parent=1 // pred_check_branch
      %15 = sbr.rel (0) target = $region9
    $region8: #{tpu_custom_call.1} parent=1 // pred_region
      _
    $region9: #{tpu_custom_call.1} parent=1 // pred_fallthru
      _
    // Predicated region
    $region10: #{tpu_custom_call.1} parent=1 // pred_check
      _
    $region11: #{tpu_custom_call.1} parent=1 // pred_check_branch
      %17 = sbr.rel (0) target = $region13
    $region12: #{tpu_custom_call.1} parent=1 // pred_region
      _
    $region13: #{tpu_custom_call.1} parent=1 // pred_fallthru
      _
    // Predicated region
    $region14: #{tpu_custom_call.1} parent=1 // pred_check
      _
    $region15: #{tpu_custom_call.1} parent=1 // pred_check_branch
      %19 = sbr.rel (0) target = $region17
    $region16: #{tpu_custom_call.1} parent=1 // pred_region
      _
    $region17: #{tpu_custom_call.1} parent=1 // pred_fallthru
      _
    // Predicated region
    $region18: #{tpu_custom_call.1} parent=1 // pred_check
      _
    $region19: #{tpu_custom_call.1} parent=1 // pred_check_branch
      %21 = sbr.rel (0) target = $region21
    $region20: #{tpu_custom_call.1} parent=1 // pred_region
      _
    $region21: #{tpu_custom_call.1} parent=1 // pred_fallthru
      _
    %p23 = scmp.eq.s32.totalorder 0, 0
    // Predicated region
    $region22: #{tpu_custom_call.1} parent=1 // pred_check
      %p24 = pneg %p23
    $region23: #{tpu_custom_call.1} parent=1 // pred_check_branch
      %26 = sbr.rel (%p24) target = $region25
    $region24: #{tpu_custom_call.1} parent=1 // pred_region
      %vm27 = vcmask 517120
      %28 = vst.msk [vmem:[#allocation2] sm:$0x3] %vm27, 0.0
    $region25: #{tpu_custom_call.1} parent=1 // pred_fallthru
      _
    %v29 = vld [vmem:[%s0] sm:$0xf]
    %v30 = vld [vmem:[%s0 + $0x4] sm:$0xf]
    %v31 = vld [vmem:[%s0 + $0x8] sm:$0xf]
    %v32 = vld [vmem:[%s0 + $0xc] sm:$0xf]
    %v33 = vld [vmem:[%s0 + $0x10] sm:$0xf]
    %v34 = vld [vmem:[%s0 + $0x14] sm:$0xf]
    %v35 = vld [vmem:[%s0 + $0x18] sm:$0xf]
    %v36 = vld [vmem:[%s0 + $0x1c] sm:$0xf]
    %v37 = vld [vmem:[%s0 + $0x20] sm:$0xf]
    %v38 = vld [vmem:[%s0 + $0x24] sm:$0xf]
    %v39 = vld [vmem:[%s0 + $0x28] sm:$0xf]
    %v40 = vld [vmem:[%s0 + $0x2c] sm:$0xf]
    %v41 = vld [vmem:[%s0 + $0x30] sm:$0xf]
    %v42 = vld [vmem:[%s0 + $0x34] sm:$0xf]
    %v43 = vld [vmem:[%s0 + $0x38] sm:$0xf]
    %v44 = vld [vmem:[%s0 + $0x3c] sm:$0xf]
    %v45 = vld [vmem:[%s0 + $0x40] sm:$0xf]
    %v46 = vld [vmem:[%s0 + $0x44] sm:$0xf]
    %v47 = vld [vmem:[%s0 + $0x48] sm:$0xf]
    %v48 = vld [vmem:[%s0 + $0x4c] sm:$0xf]
    %v49 = vld [vmem:[%s0 + $0x50] sm:$0xf]
    %v50 = vld [vmem:[%s0 + $0x54] sm:$0xf]
    %v51 = vld [vmem:[%s0 + $0x58] sm:$0xf]
    %v52 = vld [vmem:[%s0 + $0x5c] sm:$0xf]
    %v53 = vld [vmem:[%s0 + $0x60] sm:$0xf]
    %v54 = vld [vmem:[%s0 + $0x64] sm:$0xf]
    %v55 = vld [vmem:[%s0 + $0x68] sm:$0xf]
    %v56 = vld [vmem:[%s0 + $0x6c] sm:$0xf]
    %v57 = vld [vmem:[%s0 + $0x70] sm:$0xf]
    %v58 = vld [vmem:[%s0 + $0x74] sm:$0xf]
    %v59 = vld [vmem:[%s0 + $0x78] sm:$0xf]
    %v60 = vld [vmem:[%s0 + $0x7c] sm:$0xf]
    %v61 = vld [vmem:[%s0 + $0x80] sm:$0xf]
    %v62 = vld [vmem:[%s0 + $0x84] sm:$0xf]
    %v63 = vld [vmem:[%s0 + $0x88] sm:$0xf]
    %v64 = vld [vmem:[%s0 + $0x8c] sm:$0xf]
    %v65 = vld [vmem:[%s0 + $0x90] sm:$0xf]
    %v66 = vld [vmem:[%s0 + $0x94] sm:$0xf]
    %v67 = vld [vmem:[%s0 + $0x98] sm:$0xf]
    %v68 = vld [vmem:[%s0 + $0x9c] sm:$0xf]
    %v69 = vld [vmem:[%s0 + $0xa0] sm:$0xf]
    %v70 = vld [vmem:[%s0 + $0xa4] sm:$0xf]
    %v71 = vld [vmem:[%s0 + $0xa8] sm:$0xf]
    %v72 = vld [vmem:[%s0 + $0xac] sm:$0xf]
    %v73 = vld [vmem:[%s0 + $0xb0] sm:$0xf]
    %v74 = vld [vmem:[%s0 + $0xb4] sm:$0xf]
    %v75 = vld [vmem:[%s0 + $0xb8] sm:$0xf]
    %v76 = vld [vmem:[%s0 + $0xbc] sm:$0xf]
    %v77 = vld [vmem:[%s0 + $0xc0] sm:$0xf]
    %v78 = vld [vmem:[%s0 + $0xc4] sm:$0xf]
    %v79 = vld [vmem:[%s0 + $0xc8] sm:$0xf]
    %v80 = vld [vmem:[%s0 + $0xcc] sm:$0xf]
    %v81 = vld [vmem:[%s0 + $0xd0] sm:$0xf]
    %v82 = vld [vmem:[%s0 + $0xd4] sm:$0xf]
    %v83 = vld [vmem:[%s0 + $0xd8] sm:$0xf]
    %v84 = vld [vmem:[%s0 + $0xdc] sm:$0xf]
    %v85 = vld [vmem:[%s0 + $0xe0] sm:$0xf]
    %v86 = vld [vmem:[%s0 + $0xe4] sm:$0xf]
    %v87 = vld [vmem:[%s0 + $0xe8] sm:$0xf]
    %v88 = vld [vmem:[%s0 + $0xec] sm:$0xf]
    %v89 = vld [vmem:[%s0 + $0xf0] sm:$0xf]
    %v90 = vld [vmem:[%s0 + $0xf4] sm:$0xf]
    %v91 = vld [vmem:[%s0 + $0xf8] sm:$0xf]
    %v92 = vld [vmem:[%s0 + $0xfc] sm:$0xf]
    %v93 = vld [vmem:[%s1] sm:$0xf]
    %v94 = vld [vmem:[%s1 + $0x4] sm:$0xf]
    %v95 = vld [vmem:[%s1 + $0x8] sm:$0xf]
    %v96 = vld [vmem:[%s1 + $0xc] sm:$0x3]
    %v97 = vld [vmem:[%s2] sm:$0x1]
    %v99 = vlaneseq
    %v100 = vshrl.u32 %v99, 7
    %v101 = vsub.s32 0, %v100
    %v102 = vrot.slane %v97, %v101
    %v168 = vunpack.c.l.b16 %v29
    %v169 = vunpack.c.l.b16 %v30
    %v170 = vunpack.c.l.b16 %v31
    %v171 = vunpack.c.l.b16 %v32
    %v172 = vunpack.c.l.b16 %v33
    %v173 = vunpack.c.l.b16 %v34
    %v174 = vunpack.c.l.b16 %v35
    %v175 = vunpack.c.l.b16 %v36
    %v176 = vunpack.c.l.b16 %v37
    %v177 = vunpack.c.l.b16 %v38
    %v178 = vunpack.c.l.b16 %v39
    %v179 = vunpack.c.l.b16 %v40
    %v180 = vunpack.c.l.b16 %v41
    %v181 = vunpack.c.l.b16 %v42
    %v182 = vunpack.c.l.b16 %v43
    %v183 = vunpack.c.l.b16 %v44
    %v184 = vunpack.c.l.b16 %v45
    %v185 = vunpack.c.l.b16 %v46
    %v186 = vunpack.c.l.b16 %v47
    %v187 = vunpack.c.l.b16 %v48
    %v188 = vunpack.c.l.b16 %v49
    %v189 = vunpack.c.l.b16 %v50
    %v190 = vunpack.c.l.b16 %v51
    %v191 = vunpack.c.l.b16 %v52
    %v192 = vunpack.c.l.b16 %v53
    %v193 = vunpack.c.l.b16 %v54
    %v194 = vunpack.c.l.b16 %v55
    %v195 = vunpack.c.l.b16 %v56
    %v196 = vunpack.c.l.b16 %v57
    %v197 = vunpack.c.l.b16 %v58
    %v198 = vunpack.c.l.b16 %v59
    %v199 = vunpack.c.l.b16 %v60
    %v200 = vunpack.c.l.b16 %v61
    %v201 = vunpack.c.l.b16 %v62
    %v202 = vunpack.c.l.b16 %v63
    %v203 = vunpack.c.l.b16 %v64
    %v204 = vunpack.c.l.b16 %v65
    %v205 = vunpack.c.l.b16 %v66
    %v206 = vunpack.c.l.b16 %v67
    %v207 = vunpack.c.l.b16 %v68
    %v208 = vunpack.c.l.b16 %v69
    %v209 = vunpack.c.l.b16 %v70
    %v210 = vunpack.c.l.b16 %v71
    %v211 = vunpack.c.l.b16 %v72
    %v212 = vunpack.c.l.b16 %v73
    %v213 = vunpack.c.l.b16 %v74
    %v214 = vunpack.c.l.b16 %v75
    %v215 = vunpack.c.l.b16 %v76
    %v216 = vunpack.c.l.b16 %v77
    %v217 = vunpack.c.l.b16 %v78
    %v218 = vunpack.c.l.b16 %v79
    %v219 = vunpack.c.l.b16 %v80
    %v220 = vunpack.c.l.b16 %v81
    %v221 = vunpack.c.l.b16 %v82
    %v222 = vunpack.c.l.b16 %v83
    %v223 = vunpack.c.l.b16 %v84
    %v224 = vunpack.c.l.b16 %v85
    %v225 = vunpack.c.l.b16 %v86
    %v226 = vunpack.c.l.b16 %v87
    %v227 = vunpack.c.l.b16 %v88
    %v228 = vunpack.c.l.b16 %v89
    %v229 = vunpack.c.l.b16 %v90
    %v230 = vunpack.c.l.b16 %v91
    %v231 = vunpack.c.l.b16 %v92
    %v232 = vpack.c.b16 %v169, %v168
    %v233 = vpack.c.b16 %v171, %v170
    %v234 = vpack.c.b16 %v173, %v172
    %v235 = vpack.c.b16 %v175, %v174
    %v236 = vpack.c.b16 %v177, %v176
    %v237 = vpack.c.b16 %v179, %v178
    %v238 = vpack.c.b16 %v181, %v180
    %v239 = vpack.c.b16 %v183, %v182
    %v240 = vpack.c.b16 %v185, %v184
    %v241 = vpack.c.b16 %v187, %v186
    %v242 = vpack.c.b16 %v189, %v188
    %v243 = vpack.c.b16 %v191, %v190
    %v244 = vpack.c.b16 %v193, %v192
    %v245 = vpack.c.b16 %v195, %v194
    %v246 = vpack.c.b16 %v197, %v196
    %v247 = vpack.c.b16 %v199, %v198
    %v248 = vpack.c.b16 %v201, %v200
    %v249 = vpack.c.b16 %v203, %v202
    %v250 = vpack.c.b16 %v205, %v204
    %v251 = vpack.c.b16 %v207, %v206
    %v252 = vpack.c.b16 %v209, %v208
    %v253 = vpack.c.b16 %v211, %v210
    %v254 = vpack.c.b16 %v213, %v212
    %v255 = vpack.c.b16 %v215, %v214
    %v256 = vpack.c.b16 %v217, %v216
    %v257 = vpack.c.b16 %v219, %v218
    %v258 = vpack.c.b16 %v221, %v220
    %v259 = vpack.c.b16 %v223, %v222
    %v260 = vpack.c.b16 %v225, %v224
    %v261 = vpack.c.b16 %v227, %v226
    %v262 = vpack.c.b16 %v229, %v228
    %v263 = vpack.c.b16 %v231, %v230
    %v268 = vunpack.c.l.b16 %v93
    %v269 = vunpack.c.l.b16 %v94
    %v270 = vunpack.c.l.b16 %v95
    %v271 = vunpack.c.l.b16 %v96
    %v272 = vpack.c.b16 %v269, %v268
    %v273 = vpack.c.b16 %v271, %v270
    %vm275 = vcmask 220160
    %v277 = vsel %vm275, %v232, 0
    %v280 = vsel %vm275, %v233, 0
    %v283 = vsel %vm275, %v234, 0
    %v286 = vsel %vm275, %v235, 0
    %v289 = vsel %vm275, %v236, 0
    %v292 = vsel %vm275, %v237, 0
    %v295 = vsel %vm275, %v238, 0
    %v298 = vsel %vm275, %v239, 0
    %v301 = vsel %vm275, %v240, 0
    %v304 = vsel %vm275, %v241, 0
    %v307 = vsel %vm275, %v242, 0
    %v310 = vsel %vm275, %v243, 0
    %v313 = vsel %vm275, %v244, 0
    %v316 = vsel %vm275, %v245, 0
    %v319 = vsel %vm275, %v246, 0
    %v322 = vsel %vm275, %v247, 0
    %v325 = vsel %vm275, %v248, 0
    %v328 = vsel %vm275, %v249, 0
    %v331 = vsel %vm275, %v250, 0
    %v334 = vsel %vm275, %v251, 0
    %v337 = vsel %vm275, %v252, 0
    %v340 = vsel %vm275, %v253, 0
    %v343 = vsel %vm275, %v254, 0
    %v346 = vsel %vm275, %v255, 0
    %v349 = vsel %vm275, %v256, 0
    %v352 = vsel %vm275, %v257, 0
    %v355 = vsel %vm275, %v258, 0
    %v358 = vsel %vm275, %v259, 0
    %v361 = vsel %vm275, %v260, 0
    %v364 = vsel %vm275, %v261, 0
    %v367 = vsel %vm275, %v262, 0
    %v370 = vsel %vm275, %v263, 0
    %vm372 = vcmask 1044480
    %vm373 = vcmask 1045504
    %v374 = vsel %vm372, 4294967295, 65535
    %v375 = vsel %vm373, %v374, 0
    %v377 = vand.u32 %v273, %v375
    %379 = vmatprep.subr.bf16.mxu0 0
    %380 = vmatpush1.bf16.msra.mxu0 %v272
    %381 = vmatprep.subr.bf16.mxu0 0
    %382 = vmatpush1.bf16.msra.mxu0 %v377
    %383 = vmatprep.subr.bf16.mxu0 0
    %384 = vmatpush1.bf16.msra.mxu0 0
    %385 = vmatprep.subr.bf16.mxu0 0
    %386 = vmatpush1.bf16.msra.mxu0 0
    %387 = vmatprep.subr.bf16.mxu0 0
    %388 = vmatpush1.bf16.msra.mxu0 0
    %389 = vmatprep.subr.bf16.mxu0 0
    %390 = vmatpush1.bf16.msra.mxu0 0
    %391 = vmatprep.subr.bf16.mxu0 0
    %392 = vmatpush1.bf16.msra.mxu0 0
    %393 = vmatprep.subr.bf16.mxu0 0
    %394 = vmatpush1.bf16.msra.mxu0 0
    %395 = vmatprep.subr.bf16.mxu0 0
    %396 = vmatpush1.bf16.msra.mxu0 0
    %397 = vmatprep.subr.bf16.mxu0 0
    %398 = vmatpush1.bf16.msra.mxu0 0
    %399 = vmatprep.subr.bf16.mxu0 0
    %400 = vmatpush1.bf16.msra.mxu0 0
    %401 = vmatprep.subr.bf16.mxu0 0
    %402 = vmatpush1.bf16.msra.mxu0 0
    %403 = vmatprep.subr.bf16.mxu0 0
    %404 = vmatpush1.bf16.msra.mxu0 0
    %405 = vmatprep.subr.bf16.mxu0 0
    %406 = vmatpush1.bf16.msra.mxu0 0
    %407 = vmatprep.subr.bf16.mxu0 0
    %408 = vmatpush1.bf16.msra.mxu0 0
    %409 = vmatprep.subr.bf16.mxu0 0
    %410 = vmatpush1.bf16.msra.mxu0 0
    %411 = vmatprep.mubr.bf16.mxu0 0
    %412 = vmatmul.mubr.bf16.gmra.mrb[0].mxu0 %v277
    %v413 = vpop.f32.mrb[0].mxu0
    %v414 = vadd.f32 %v102, %v413
    %v415 = vpop.f32.mrb[0].mxu0
    %v416 = vpop.f32.mrb[0].mxu0
    %v417 = vadd.f32 %v102, %v416
    %v418 = vpop.f32.mrb[0].mxu0
    %419 = vmatprep.mubr.bf16.mxu0 0
    %420 = vmatmul.mubr.bf16.gmra.mrb[0].mxu0 %v280
    %v421 = vpop.f32.mrb[0].mxu0
    %v422 = vadd.f32 %v102, %v421
    %v423 = vpop.f32.mrb[0].mxu0
    %v424 = vpop.f32.mrb[0].mxu0
    %v425 = vadd.f32 %v102, %v424
    %v426 = vpop.f32.mrb[0].mxu0
    %427 = vmatprep.mubr.bf16.mxu0 0
    %428 = vmatmul.mubr.bf16.gmra.mrb[0].mxu0 %v283
    %v429 = vpop.f32.mrb[0].mxu0
    %v430 = vadd.f32 %v102, %v429
    %v431 = vpop.f32.mrb[0].mxu0
    %v432 = vpop.f32.mrb[0].mxu0
    %v433 = vadd.f32 %v102, %v432
    %v434 = vpop.f32.mrb[0].mxu0
    %435 = vmatprep.mubr.bf16.mxu0 0
    %436 = vmatmul.mubr.bf16.gmra.mrb[0].mxu0 %v286
    %v437 = vpop.f32.mrb[0].mxu0
    %v438 = vadd.f32 %v102, %v437
    %v439 = vpop.f32.mrb[0].mxu0
    %v440 = vpop.f32.mrb[0].mxu0
    %v441 = vadd.f32 %v102, %v440
    %v442 = vpop.f32.mrb[0].mxu0
    %443 = vmatprep.mubr.bf16.mxu0 0
    %444 = vmatmul.mubr.bf16.gmra.mrb[0].mxu0 %v289
    %v445 = vpop.f32.mrb[0].mxu0
    %v446 = vadd.f32 %v102, %v445
    %v447 = vpop.f32.mrb[0].mxu0
    %v448 = vpop.f32.mrb[0].mxu0
    %v449 = vadd.f32 %v102, %v448
    %v450 = vpop.f32.mrb[0].mxu0
    %451 = vmatprep.mubr.bf16.mxu0 0
    %452 = vmatmul.mubr.bf16.gmra.mrb[0].mxu0 %v292
    %v453 = vpop.f32.mrb[0].mxu0
    %v454 = vadd.f32 %v102, %v453
    %v455 = vpop.f32.mrb[0].mxu0
    %v456 = vpop.f32.mrb[0].mxu0
    %v457 = vadd.f32 %v102, %v456
    %v458 = vpop.f32.mrb[0].mxu0
    %459 = vmatprep.mubr.bf16.mxu0 0
    %460 = vmatmul.mubr.bf16.gmra.mrb[0].mxu0 %v295
    %v461 = vpop.f32.mrb[0].mxu0
    %v462 = vadd.f32 %v102, %v461
    %v463 = vpop.f32.mrb[0].mxu0
    %v464 = vpop.f32.mrb[0].mxu0
    %v465 = vadd.f32 %v102, %v464
    %v466 = vpop.f32.mrb[0].mxu0
    %467 = vmatprep.mubr.bf16.mxu0 0
    %468 = vmatmul.mubr.bf16.gmra.mrb[0].mxu0 %v298
    %v469 = vpop.f32.mrb[0].mxu0
    %v470 = vadd.f32 %v102, %v469
    %v471 = vpop.f32.mrb[0].mxu0
    %v472 = vpop.f32.mrb[0].mxu0
    %v473 = vadd.f32 %v102, %v472
    %v474 = vpop.f32.mrb[0].mxu0
    %475 = vmatprep.mubr.bf16.mxu0 0
    %476 = vmatmul.mubr.bf16.gmra.mrb[0].mxu0 %v301
    %v477 = vpop.f32.mrb[0].mxu0
    %v478 = vadd.f32 %v102, %v477
    %v479 = vpop.f32.mrb[0].mxu0
    %v480 = vpop.f32.mrb[0].mxu0
    %v481 = vadd.f32 %v102, %v480
    %v482 = vpop.f32.mrb[0].mxu0
    %483 = vmatprep.mubr.bf16.mxu0 0
    %484 = vmatmul.mubr.bf16.gmra.mrb[0].mxu0 %v304
    %v485 = vpop.f32.mrb[0].mxu0
    %v486 = vadd.f32 %v102, %v485
    %v487 = vpop.f32.mrb[0].mxu0
    %v488 = vpop.f32.mrb[0].mxu0
    %v489 = vadd.f32 %v102, %v488
    %v490 = vpop.f32.mrb[0].mxu0
    %491 = vmatprep.mubr.bf16.mxu0 0
    %492 = vmatmul.mubr.bf16.gmra.mrb[0].mxu0 %v307
    %v493 = vpop.f32.mrb[0].mxu0
    %v494 = vadd.f32 %v102, %v493
    %v495 = vpop.f32.mrb[0].mxu0
    %v496 = vpop.f32.mrb[0].mxu0
    %v497 = vadd.f32 %v102, %v496
    %v498 = vpop.f32.mrb[0].mxu0
    %499 = vmatprep.mubr.bf16.mxu0 0
    %500 = vmatmul.mubr.bf16.gmra.mrb[0].mxu0 %v310
    %v501 = vpop.f32.mrb[0].mxu0
    %v502 = vadd.f32 %v102, %v501
    %v503 = vpop.f32.mrb[0].mxu0
    %v504 = vpop.f32.mrb[0].mxu0
    %v505 = vadd.f32 %v102, %v504
    %v506 = vpop.f32.mrb[0].mxu0
    %507 = vmatprep.mubr.bf16.mxu0 0
    %508 = vmatmul.mubr.bf16.gmra.mrb[0].mxu0 %v313
    %v509 = vpop.f32.mrb[0].mxu0
    %v510 = vadd.f32 %v102, %v509
    %v511 = vpop.f32.mrb[0].mxu0
    %v512 = vpop.f32.mrb[0].mxu0
    %v513 = vadd.f32 %v102, %v512
    %v514 = vpop.f32.mrb[0].mxu0
    %515 = vmatprep.mubr.bf16.mxu0 0
    %516 = vmatmul.mubr.bf16.gmra.mrb[0].mxu0 %v316
    %v517 = vpop.f32.mrb[0].mxu0
    %v518 = vadd.f32 %v102, %v517
    %v519 = vpop.f32.mrb[0].mxu0
    %v520 = vpop.f32.mrb[0].mxu0
    %v521 = vadd.f32 %v102, %v520
    %v522 = vpop.f32.mrb[0].mxu0
    %523 = vmatprep.mubr.bf16.mxu0 0
    %524 = vmatmul.mubr.bf16.gmra.mrb[0].mxu0 %v319
    %v525 = vpop.f32.mrb[0].mxu0
    %v526 = vadd.f32 %v102, %v525
    %v527 = vpop.f32.mrb[0].mxu0
    %v528 = vpop.f32.mrb[0].mxu0
    %v529 = vadd.f32 %v102, %v528
    %v530 = vpop.f32.mrb[0].mxu0
    %531 = vmatprep.mubr.bf16.mxu0 0
    %532 = vmatmul.mubr.bf16.gmra.mrb[0].mxu0 %v322
    %v533 = vpop.f32.mrb[0].mxu0
    %v534 = vadd.f32 %v102, %v533
    %v535 = vpop.f32.mrb[0].mxu0
    %v536 = vpop.f32.mrb[0].mxu0
    %v537 = vadd.f32 %v102, %v536
    %v538 = vpop.f32.mrb[0].mxu0
    %539 = vmatprep.mubr.bf16.mxu0 0
    %540 = vmatmul.mubr.bf16.gmra.mrb[0].mxu0 %v325
    %v541 = vpop.f32.mrb[0].mxu0
    %v542 = vadd.f32 %v102, %v541
    %v543 = vpop.f32.mrb[0].mxu0
    %v544 = vpop.f32.mrb[0].mxu0
    %v545 = vadd.f32 %v102, %v544
    %v546 = vpop.f32.mrb[0].mxu0
    %547 = vmatprep.mubr.bf16.mxu0 0
    %548 = vmatmul.mubr.bf16.gmra.mrb[0].mxu0 %v328
    %v549 = vpop.f32.mrb[0].mxu0
    %v550 = vadd.f32 %v102, %v549
    %v551 = vpop.f32.mrb[0].mxu0
    %v552 = vpop.f32.mrb[0].mxu0
    %v553 = vadd.f32 %v102, %v552
    %v554 = vpop.f32.mrb[0].mxu0
    %555 = vmatprep.mubr.bf16.mxu0 0
    %556 = vmatmul.mubr.bf16.gmra.mrb[0].mxu0 %v331
    %v557 = vpop.f32.mrb[0].mxu0
    %v558 = vadd.f32 %v102, %v557
    %v559 = vpop.f32.mrb[0].mxu0
    %v560 = vpop.f32.mrb[0].mxu0
    %v561 = vadd.f32 %v102, %v560
    %v562 = vpop.f32.mrb[0].mxu0
    %563 = vmatprep.mubr.bf16.mxu0 0
    %564 = vmatmul.mubr.bf16.gmra.mrb[0].mxu0 %v334
    %v565 = vpop.f32.mrb[0].mxu0
    %v566 = vadd.f32 %v102, %v565
    %v567 = vpop.f32.mrb[0].mxu0
    %v568 = vpop.f32.mrb[0].mxu0
    %v569 = vadd.f32 %v102, %v568
    %v570 = vpop.f32.mrb[0].mxu0
    %571 = vmatprep.mubr.bf16.mxu0 0
    %572 = vmatmul.mubr.bf16.gmra.mrb[0].mxu0 %v337
    %v573 = vpop.f32.mrb[0].mxu0
    %v574 = vadd.f32 %v102, %v573
    %v575 = vpop.f32.mrb[0].mxu0
    %v576 = vpop.f32.mrb[0].mxu0
    %v577 = vadd.f32 %v102, %v576
    %v578 = vpop.f32.mrb[0].mxu0
    %579 = vmatprep.mubr.bf16.mxu0 0
    %580 = vmatmul.mubr.bf16.gmra.mrb[0].mxu0 %v340
    %v581 = vpop.f32.mrb[0].mxu0
    %v582 = vadd.f32 %v102, %v581
    %v583 = vpop.f32.mrb[0].mxu0
    %v584 = vpop.f32.mrb[0].mxu0
    %v585 = vadd.f32 %v102, %v584
    %v586 = vpop.f32.mrb[0].mxu0
    %587 = vmatprep.mubr.bf16.mxu0 0
    %588 = vmatmul.mubr.bf16.gmra.mrb[0].mxu0 %v343
    %v589 = vpop.f32.mrb[0].mxu0
    %v590 = vadd.f32 %v102, %v589
    %v591 = vpop.f32.mrb[0].mxu0
    %v592 = vpop.f32.mrb[0].mxu0
    %v593 = vadd.f32 %v102, %v592
    %v594 = vpop.f32.mrb[0].mxu0
    %595 = vmatprep.mubr.bf16.mxu0 0
    %596 = vmatmul.mubr.bf16.gmra.mrb[0].mxu0 %v346
    %v597 = vpop.f32.mrb[0].mxu0
    %v598 = vadd.f32 %v102, %v597
    %v599 = vpop.f32.mrb[0].mxu0
    %v600 = vpop.f32.mrb[0].mxu0
    %v601 = vadd.f32 %v102, %v600
    %v602 = vpop.f32.mrb[0].mxu0
    %603 = vmatprep.mubr.bf16.mxu0 0
    %604 = vmatmul.mubr.bf16.gmra.mrb[0].mxu0 %v349
    %v605 = vpop.f32.mrb[0].mxu0
    %v606 = vadd.f32 %v102, %v605
    %v607 = vpop.f32.mrb[0].mxu0
    %v608 = vpop.f32.mrb[0].mxu0
    %v609 = vadd.f32 %v102, %v608
    %v610 = vpop.f32.mrb[0].mxu0
    %611 = vmatprep.mubr.bf16.mxu0 0
    %612 = vmatmul.mubr.bf16.gmra.mrb[0].mxu0 %v352
    %v613 = vpop.f32.mrb[0].mxu0
    %v614 = vadd.f32 %v102, %v613
    %v615 = vpop.f32.mrb[0].mxu0
    %v616 = vpop.f32.mrb[0].mxu0
    %v617 = vadd.f32 %v102, %v616
    %v618 = vpop.f32.mrb[0].mxu0
    %619 = vmatprep.mubr.bf16.mxu0 0
    %620 = vmatmul.mubr.bf16.gmra.mrb[0].mxu0 %v355
    %v621 = vpop.f32.mrb[0].mxu0
    %v622 = vadd.f32 %v102, %v621
    %v623 = vpop.f32.mrb[0].mxu0
    %v624 = vpop.f32.mrb[0].mxu0
    %v625 = vadd.f32 %v102, %v624
    %v626 = vpop.f32.mrb[0].mxu0
    %627 = vmatprep.mubr.bf16.mxu0 0
    %628 = vmatmul.mubr.bf16.gmra.mrb[0].mxu0 %v358
    %v629 = vpop.f32.mrb[0].mxu0
    %v630 = vadd.f32 %v102, %v629
    %v631 = vpop.f32.mrb[0].mxu0
    %v632 = vpop.f32.mrb[0].mxu0
    %v633 = vadd.f32 %v102, %v632
    %v634 = vpop.f32.mrb[0].mxu0
    %635 = vmatprep.mubr.bf16.mxu0 0
    %636 = vmatmul.mubr.bf16.gmra.mrb[0].mxu0 %v361
    %v637 = vpop.f32.mrb[0].mxu0
    %v638 = vadd.f32 %v102, %v637
    %v639 = vpop.f32.mrb[0].mxu0
    %v640 = vpop.f32.mrb[0].mxu0
    %v641 = vadd.f32 %v102, %v640
    %v642 = vpop.f32.mrb[0].mxu0
    %643 = vmatprep.mubr.bf16.mxu0 0
    %644 = vmatmul.mubr.bf16.gmra.mrb[0].mxu0 %v364
    %v645 = vpop.f32.mrb[0].mxu0
    %v646 = vadd.f32 %v102, %v645
    %v647 = vpop.f32.mrb[0].mxu0
    %v648 = vpop.f32.mrb[0].mxu0
    %v649 = vadd.f32 %v102, %v648
    %v650 = vpop.f32.mrb[0].mxu0
    %651 = vmatprep.mubr.bf16.mxu0 0
    %652 = vmatmul.mubr.bf16.gmra.mrb[0].mxu0 %v367
    %v653 = vpop.f32.mrb[0].mxu0
    %v654 = vadd.f32 %v102, %v653
    %v655 = vpop.f32.mrb[0].mxu0
    %v656 = vpop.f32.mrb[0].mxu0
    %v657 = vadd.f32 %v102, %v656
    %v658 = vpop.f32.mrb[0].mxu0
    %659 = vmatprep.mubr.bf16.mxu0 0
    %660 = vmatmul.mubr.bf16.gmra.mrb[0].mxu0 %v370
    %v661 = vpop.f32.mrb[0].mxu0
    %v662 = vadd.f32 %v102, %v661
    %v663 = vpop.f32.mrb[0].mxu0
    %v664 = vpop.f32.mrb[0].mxu0
    %v665 = vadd.f32 %v102, %v664
    %v666 = vpop.f32.mrb[0].mxu0
    %667 = vdwg.mxu0
    %v668 = vmax.f32 %v414, 0.0
    %v669 = vmax.f32 %v417, 0.0
    %v670 = vmax.f32 %v422, 0.0
    %v671 = vmax.f32 %v425, 0.0
    %v672 = vmax.f32 %v430, 0.0
    %v673 = vmax.f32 %v433, 0.0
    %v674 = vmax.f32 %v438, 0.0
    %v675 = vmax.f32 %v441, 0.0
    %v676 = vmax.f32 %v446, 0.0
    %v677 = vmax.f32 %v449, 0.0
    %v678 = vmax.f32 %v454, 0.0
    %v679 = vmax.f32 %v457, 0.0
    %v680 = vmax.f32 %v462, 0.0
    %v681 = vmax.f32 %v465, 0.0
    %v682 = vmax.f32 %v470, 0.0
    %v683 = vmax.f32 %v473, 0.0
    %v684 = vmax.f32 %v478, 0.0
    %v685 = vmax.f32 %v481, 0.0
    %v686 = vmax.f32 %v486, 0.0
    %v687 = vmax.f32 %v489, 0.0
    %v688 = vmax.f32 %v494, 0.0
    %v689 = vmax.f32 %v497, 0.0
    %v690 = vmax.f32 %v502, 0.0
    %v691 = vmax.f32 %v505, 0.0
    %v692 = vmax.f32 %v510, 0.0
    %v693 = vmax.f32 %v513, 0.0
    %v694 = vmax.f32 %v518, 0.0
    %v695 = vmax.f32 %v521, 0.0
    %v696 = vmax.f32 %v526, 0.0
    %v697 = vmax.f32 %v529, 0.0
    %v698 = vmax.f32 %v534, 0.0
    %v699 = vmax.f32 %v537, 0.0
    %v700 = vmax.f32 %v542, 0.0
    %v701 = vmax.f32 %v545, 0.0
    %v702 = vmax.f32 %v550, 0.0
    %v703 = vmax.f32 %v553, 0.0
    %v704 = vmax.f32 %v558, 0.0
    %v705 = vmax.f32 %v561, 0.0
    %v706 = vmax.f32 %v566, 0.0
    %v707 = vmax.f32 %v569, 0.0
    %v708 = vmax.f32 %v574, 0.0
    %v709 = vmax.f32 %v577, 0.0
    %v710 = vmax.f32 %v582, 0.0
    %v711 = vmax.f32 %v585, 0.0
    %v712 = vmax.f32 %v590, 0.0
    %v713 = vmax.f32 %v593, 0.0
    %v714 = vmax.f32 %v598, 0.0
    %v715 = vmax.f32 %v601, 0.0
    %v716 = vmax.f32 %v606, 0.0
    %v717 = vmax.f32 %v609, 0.0
    %v718 = vmax.f32 %v614, 0.0
    %v719 = vmax.f32 %v617, 0.0
    %v720 = vmax.f32 %v622, 0.0
    %v721 = vmax.f32 %v625, 0.0
    %v722 = vmax.f32 %v630, 0.0
    %v723 = vmax.f32 %v633, 0.0
    %v724 = vmax.f32 %v638, 0.0
    %v725 = vmax.f32 %v641, 0.0
    %v726 = vmax.f32 %v646, 0.0
    %v727 = vmax.f32 %v649, 0.0
    %v728 = vmax.f32 %v654, 0.0
    %v729 = vmax.f32 %v657, 0.0
    %v730 = vmax.f32 %v662, 0.0
    %v731 = vmax.f32 %v665, 0.0
    %v732 = vld [vmem:[%s3] sm:$0xf]
    %v733 = vld [vmem:[%s3 + $0x4] sm:$0xf]
    %v734 = vld [vmem:[%s3 + $0x8] sm:$0xf]
    %v735 = vld [vmem:[%s3 + $0xc] sm:$0xf]
    %v736 = vld [vmem:[%s3 + $0x10] sm:$0xf]
    %v737 = vld [vmem:[%s3 + $0x14] sm:$0xf]
    %v738 = vld [vmem:[%s3 + $0x18] sm:$0xf]
    %v739 = vld [vmem:[%s3 + $0x1c] sm:$0xf]
    %v740 = vld [vmem:[%s3 + $0x20] sm:$0xf]
    %v741 = vld [vmem:[%s3 + $0x24] sm:$0xf]
    %v742 = vld [vmem:[%s3 + $0x28] sm:$0xf]
    %v743 = vld [vmem:[%s3 + $0x2c] sm:$0xf]
    %v744 = vld [vmem:[%s3 + $0x30] sm:$0xf]
    %v745 = vld [vmem:[%s3 + $0x34] sm:$0xf]
    %v746 = vld [vmem:[%s3 + $0x38] sm:$0xf]
    %v747 = vld [vmem:[%s3 + $0x3c] sm:$0xf]
    %v748 = vld [vmem:[%s3 + $0x40] sm:$0xf]
    %v749 = vld [vmem:[%s3 + $0x44] sm:$0xf]
    %v750 = vld [vmem:[%s3 + $0x48] sm:$0xf]
    %v751 = vld [vmem:[%s3 + $0x4c] sm:$0xf]
    %v752 = vld [vmem:[%s3 + $0x50] sm:$0xf]
    %v753 = vld [vmem:[%s3 + $0x54] sm:$0xf]
    %v754 = vld [vmem:[%s3 + $0x58] sm:$0xf]
    %v755 = vld [vmem:[%s3 + $0x5c] sm:$0xf]
    %v756 = vld [vmem:[%s3 + $0x60] sm:$0xf]
    %v757 = vld [vmem:[%s3 + $0x64] sm:$0xf]
    %v758 = vld [vmem:[%s3 + $0x68] sm:$0xf]
    %v759 = vld [vmem:[%s3 + $0x6c] sm:$0xf]
    %v760 = vld [vmem:[%s3 + $0x70] sm:$0xf]
    %v761 = vld [vmem:[%s3 + $0x74] sm:$0xf]
    %v762 = vld [vmem:[%s3 + $0x78] sm:$0xf]
    %v763 = vld [vmem:[%s3 + $0x7c] sm:$0xf]
    %v764 = vunpack.c.l.bf16 %v732
    %v765 = vunpack.c.l.bf16 %v733
    %v766 = vunpack.c.l.bf16 %v734
    %v767 = vunpack.c.l.bf16 %v735
    %v768 = vunpack.c.l.bf16 %v736
    %v769 = vunpack.c.l.bf16 %v737
    %v770 = vunpack.c.l.bf16 %v738
    %v771 = vunpack.c.l.bf16 %v739
    %v772 = vunpack.c.l.bf16 %v740
    %v773 = vunpack.c.l.bf16 %v741
    %v774 = vunpack.c.l.bf16 %v742
    %v775 = vunpack.c.l.bf16 %v743
    %v776 = vunpack.c.l.bf16 %v744
    %v777 = vunpack.c.l.bf16 %v745
    %v778 = vunpack.c.l.bf16 %v746
    %v779 = vunpack.c.l.bf16 %v747
    %v780 = vunpack.c.l.bf16 %v748
    %v781 = vunpack.c.l.bf16 %v749
    %v782 = vunpack.c.l.bf16 %v750
    %v783 = vunpack.c.l.bf16 %v751
    %v784 = vunpack.c.l.bf16 %v752
    %v785 = vunpack.c.l.bf16 %v753
    %v786 = vunpack.c.l.bf16 %v754
    %v787 = vunpack.c.l.bf16 %v755
    %v788 = vunpack.c.l.bf16 %v756
    %v789 = vunpack.c.l.bf16 %v757
    %v790 = vunpack.c.l.bf16 %v758
    %v791 = vunpack.c.l.bf16 %v759
    %v792 = vunpack.c.l.bf16 %v760
    %v793 = vunpack.c.l.bf16 %v761
    %v794 = vunpack.c.l.bf16 %v762
    %v795 = vunpack.c.l.bf16 %v763
    %v796 = vmul.f32 %v668, %v764
    %v797 = vmul.f32 %v669, %v765
    %v798 = vmul.f32 %v670, %v766
    %v799 = vmul.f32 %v671, %v767
    %v800 = vmul.f32 %v672, %v768
    %v801 = vmul.f32 %v673, %v769
    %v802 = vmul.f32 %v674, %v770
    %v803 = vmul.f32 %v675, %v771
    %v804 = vmul.f32 %v676, %v772
    %v805 = vmul.f32 %v677, %v773
    %v806 = vmul.f32 %v678, %v774
    %v807 = vmul.f32 %v679, %v775
    %v808 = vmul.f32 %v680, %v776
    %v809 = vmul.f32 %v681, %v777
    %v810 = vmul.f32 %v682, %v778
    %v811 = vmul.f32 %v683, %v779
    %v812 = vmul.f32 %v684, %v780
    %v813 = vmul.f32 %v685, %v781
    %v814 = vmul.f32 %v686, %v782
    %v815 = vmul.f32 %v687, %v783
    %v816 = vmul.f32 %v688, %v784
    %v817 = vmul.f32 %v689, %v785
    %v818 = vmul.f32 %v690, %v786
    %v819 = vmul.f32 %v691, %v787
    %v820 = vmul.f32 %v692, %v788
    %v821 = vmul.f32 %v693, %v789
    %v822 = vmul.f32 %v694, %v790
    %v823 = vmul.f32 %v695, %v791
    %v824 = vmul.f32 %v696, %v792
    %v825 = vmul.f32 %v697, %v793
    %v826 = vmul.f32 %v698, %v794
    %v827 = vmul.f32 %v699, %v795
    %v828 = vmul.f32 %v700, %v764
    %v829 = vmul.f32 %v701, %v765
    %v830 = vmul.f32 %v702, %v766
    %v831 = vmul.f32 %v703, %v767
    %v832 = vmul.f32 %v704, %v768
    %v833 = vmul.f32 %v705, %v769
    %v834 = vmul.f32 %v706, %v770
    %v835 = vmul.f32 %v707, %v771
    %v836 = vmul.f32 %v708, %v772
    %v837 = vmul.f32 %v709, %v773
    %v838 = vmul.f32 %v710, %v774
    %v839 = vmul.f32 %v711, %v775
    %v840 = vmul.f32 %v712, %v776
    %v841 = vmul.f32 %v713, %v777
    %v842 = vmul.f32 %v714, %v778
    %v843 = vmul.f32 %v715, %v779
    %v844 = vmul.f32 %v716, %v780
    %v845 = vmul.f32 %v717, %v781
    %v846 = vmul.f32 %v718, %v782
    %v847 = vmul.f32 %v719, %v783
    %v848 = vmul.f32 %v720, %v784
    %v849 = vmul.f32 %v721, %v785
    %v850 = vmul.f32 %v722, %v786
    %v851 = vmul.f32 %v723, %v787
    %v852 = vmul.f32 %v724, %v788
    %v853 = vmul.f32 %v725, %v789
    %v854 = vmul.f32 %v726, %v790
    %v855 = vmul.f32 %v727, %v791
    %v856 = vmul.f32 %v728, %v792
    %v857 = vmul.f32 %v729, %v793
    %v858 = vmul.f32 %v730, %v794
    %v859 = vmul.f32 %v731, %v795
    %vm860 = vcmask 523264
    %v861 = vsel %vm860, %v796, 0.0
    %v862 = vsel %vm860, %v797, 0.0
    %v863 = vadd.f32 %v861, %v862
    %v864 = vsel %vm860, %v798, 0.0
    %v865 = vadd.f32 %v863, %v864
    %v866 = vsel %vm860, %v799, 0.0
    %v867 = vadd.f32 %v865, %v866
    %v868 = vsel %vm860, %v800, 0.0
    %v869 = vadd.f32 %v867, %v868
    %v870 = vsel %vm860, %v801, 0.0
    %v871 = vadd.f32 %v869, %v870
    %v872 = vsel %vm860, %v802, 0.0
    %v873 = vadd.f32 %v871, %v872
    %v874 = vsel %vm860, %v803, 0.0
    %v875 = vadd.f32 %v873, %v874
    %v876 = vsel %vm860, %v804, 0.0
    %v877 = vadd.f32 %v875, %v876
    %v878 = vsel %vm860, %v805, 0.0
    %v879 = vadd.f32 %v877, %v878
    %v880 = vsel %vm860, %v806, 0.0
    %v881 = vadd.f32 %v879, %v880
    %v882 = vsel %vm860, %v807, 0.0
    %v883 = vadd.f32 %v881, %v882
    %v884 = vsel %vm860, %v808, 0.0
    %v885 = vadd.f32 %v883, %v884
    %v886 = vsel %vm860, %v809, 0.0
    %v887 = vadd.f32 %v885, %v886
    %v888 = vsel %vm860, %v810, 0.0
    %v889 = vadd.f32 %v887, %v888
    %v890 = vsel %vm860, %v811, 0.0
    %v891 = vadd.f32 %v889, %v890
    %v892 = vsel %vm860, %v812, 0.0
    %v893 = vadd.f32 %v891, %v892
    %v894 = vsel %vm860, %v813, 0.0
    %v895 = vadd.f32 %v893, %v894
    %v896 = vsel %vm860, %v814, 0.0
    %v897 = vadd.f32 %v895, %v896
    %v898 = vsel %vm860, %v815, 0.0
    %v899 = vadd.f32 %v897, %v898
    %v900 = vsel %vm860, %v816, 0.0
    %v901 = vadd.f32 %v899, %v900
    %v902 = vsel %vm860, %v817, 0.0
    %v903 = vadd.f32 %v901, %v902
    %v904 = vsel %vm860, %v818, 0.0
    %v905 = vadd.f32 %v903, %v904
    %v906 = vsel %vm860, %v819, 0.0
    %v907 = vadd.f32 %v905, %v906
    %v908 = vsel %vm860, %v820, 0.0
    %v909 = vadd.f32 %v907, %v908
    %v910 = vsel %vm860, %v821, 0.0
    %v911 = vadd.f32 %v909, %v910
    %v912 = vsel %vm860, %v822, 0.0
    %v913 = vadd.f32 %v911, %v912
    %v914 = vsel %vm860, %v823, 0.0
    %v915 = vadd.f32 %v913, %v914
    %v916 = vsel %vm860, %v824, 0.0
    %v917 = vadd.f32 %v915, %v916
    %v918 = vsel %vm860, %v825, 0.0
    %v919 = vadd.f32 %v917, %v918
    %v920 = vsel %vm860, %v826, 0.0
    %v921 = vadd.f32 %v919, %v920
    %v922 = vsel %vm860, %v827, 0.0
    %v923 = vadd.f32 %v921, %v922
    %v924 = vrot.slane %v923, 4
    %v925 = vadd.f32 %v923, %v924
    %v926 = vrot.slane %v925, 2
    %v927 = vadd.f32 %v925, %v926
    %v928 = vrot.slane %v927, 1
    %v929 = vadd.f32 %v927, %v928
    %v930 = vsel %vm860, %v828, 0.0
    %v931 = vsel %vm860, %v829, 0.0
    %v932 = vadd.f32 %v930, %v931
    %v933 = vsel %vm860, %v830, 0.0
    %v934 = vadd.f32 %v932, %v933
    %v935 = vsel %vm860, %v831, 0.0
    %v936 = vadd.f32 %v934, %v935
    %v937 = vsel %vm860, %v832, 0.0
    %v938 = vadd.f32 %v936, %v937
    %v939 = vsel %vm860, %v833, 0.0
    %v940 = vadd.f32 %v938, %v939
    %v941 = vsel %vm860, %v834, 0.0
    %v942 = vadd.f32 %v940, %v941
    %v943 = vsel %vm860, %v835, 0.0
    %v944 = vadd.f32 %v942, %v943
    %v945 = vsel %vm860, %v836, 0.0
    %v946 = vadd.f32 %v944, %v945
    %v947 = vsel %vm860, %v837, 0.0
    %v948 = vadd.f32 %v946, %v947
    %v949 = vsel %vm860, %v838, 0.0
    %v950 = vadd.f32 %v948, %v949
    %v951 = vsel %vm860, %v839, 0.0
    %v952 = vadd.f32 %v950, %v951
    %v953 = vsel %vm860, %v840, 0.0
    %v954 = vadd.f32 %v952, %v953
    %v955 = vsel %vm860, %v841, 0.0
    %v956 = vadd.f32 %v954, %v955
    %v957 = vsel %vm860, %v842, 0.0
    %v958 = vadd.f32 %v956, %v957
    %v959 = vsel %vm860, %v843, 0.0
    %v960 = vadd.f32 %v958, %v959
    %v961 = vsel %vm860, %v844, 0.0
    %v962 = vadd.f32 %v960, %v961
    %v963 = vsel %vm860, %v845, 0.0
    %v964 = vadd.f32 %v962, %v963
    %v965 = vsel %vm860, %v846, 0.0
    %v966 = vadd.f32 %v964, %v965
    %v967 = vsel %vm860, %v847, 0.0
    %v968 = vadd.f32 %v966, %v967
    %v969 = vsel %vm860, %v848, 0.0
    %v970 = vadd.f32 %v968, %v969
    %v971 = vsel %vm860, %v849, 0.0
    %v972 = vadd.f32 %v970, %v971
    %v973 = vsel %vm860, %v850, 0.0
    %v974 = vadd.f32 %v972, %v973
    %v975 = vsel %vm860, %v851, 0.0
    %v976 = vadd.f32 %v974, %v975
    %v977 = vsel %vm860, %v852, 0.0
    %v978 = vadd.f32 %v976, %v977
    %v979 = vsel %vm860, %v853, 0.0
    %v980 = vadd.f32 %v978, %v979
    %v981 = vsel %vm860, %v854, 0.0
    %v982 = vadd.f32 %v980, %v981
    %v983 = vsel %vm860, %v855, 0.0
    %v984 = vadd.f32 %v982, %v983
    %v985 = vsel %vm860, %v856, 0.0
    %v986 = vadd.f32 %v984, %v985
    %v987 = vsel %vm860, %v857, 0.0
    %v988 = vadd.f32 %v986, %v987
    %v989 = vsel %vm860, %v858, 0.0
    %v990 = vadd.f32 %v988, %v989
    %v991 = vsel %vm860, %v859, 0.0
    %v992 = vadd.f32 %v990, %v991
    %v993 = vrot.slane %v992, 4
    %v994 = vadd.f32 %v992, %v993
    %v995 = vrot.slane %v994, 2
    %v996 = vadd.f32 %v994, %v995
    %v997 = vrot.slane %v996, 1
    %v998 = vadd.f32 %v996, %v997
    %v999 = vld [vmem:[#allocation2] sm:$0x3]
    %vm1002 = vcmask 1041409
    %v1003 = vsel %vm1002, %v998, %v929
    %v1005 = vadd.f32 %v999, %v1003
    %vm1006 = vcmask 517120
    %1007 = vst.msk [vmem:[#allocation2] sm:$0x3] %vm1006, %v1005
    // Predicated region
    $region26: #{tpu_custom_call.1} parent=1 // pred_check
      %p1008 = pneg %p23
    $region27: #{tpu_custom_call.1} parent=1 // pred_check_branch
      %1010 = sbr.rel (%p1008) target = $region29
    $region28: #{tpu_custom_call.1} parent=1 // pred_region
      %v1011 = vld [vmem:[#allocation2] sm:$0x3]
      %v1012 = vsel %vm1006, %v1011, 0.0
      %1013 = vadd.xlane.f32.xlu0 %v1012
      %v1014 = vpop.xlane.xlu0 %1013
      %s1015 = sld [smem:[#allocation3]]
      %v1016 = vstv %s1015
      %v1017 = vadd.f32 %v1014, %v1016
      %v1019 = vlaneseq
      %v1020 = vshrl.u32 %v1019, 7
      %v1021 = vsub.s32 0, %v1020
      %v1022 = vrot.slane %v1017, %v1021
      %v1023 = vlaneseq
      %v1024 = vshrl.u32 %v1023, 7
      %v1025 = vsub.s32 1, %v1024
      %v1026 = vrot.slane %v1017, %v1025
      %1029 = vst [vmem:[#allocation4] sm:$0x1] %v1022
      %1030 = vst [vmem:[#allocation4 + $0x1] sm:$0x1] %v1026
    $region29: #{tpu_custom_call.1} parent=1 // pred_fallthru
      _
    // Predicated region
    $region30: #{tpu_custom_call.1} parent=1 // pred_check
      _
    $region31: #{tpu_custom_call.1} parent=1 // pred_check_branch
      %1032 = sbr.rel (0) target = $region33
    $region32: #{tpu_custom_call.1} parent=1 // pred_region
      %s1034 = ssub.s32 32, 32
      %1035 = vsyncadd [#allocation5], %s1034
      %s1036 = sshll.u32 [#allocation4], 4
      %s1037 = int_to_ptr.vmem [resolvable:$true] %s1036
      %1042 = dma.vmem_to_hbm [thread:$0]  %s1037, 32, %s5, [#allocation5], 16, 16, 1
    $region33: #{tpu_custom_call.1} parent=1 // pred_fallthru
      _
    // Predicated region
    $region34: #{tpu_custom_call.1} parent=1 // pred_check
      _
    $region35: #{tpu_custom_call.1} parent=1 // pred_check_branch
      %1044 = sbr.rel (0) target = $region37
    $region36: #{tpu_custom_call.1} parent=1 // pred_region
      %1045 = dma.done [#allocation5], 32
    $region37: #{tpu_custom_call.1} parent=1 // pred_fallthru
      _
    %1046 = vsyncpa [#allocation5], 1

</llo_original>
